<compile_context>
chip_gen: v7x
topology: tpu7x:2x2x1
jax: 0.10.0
libtpu: 0.0.40
codegen_flags: <defaults>
</compile_context>

<pallas_src>
import jax
import jax.numpy as jnp
from jax.experimental import pallas as pl
from jax.experimental.pallas import tpu as pltpu

_LANE = 128
_FUSED_STATE_BUDGET = 4 << 20   # max bytes of full-batch state kept VMEM-resident


def _round_up(x, m):
    return ((x + m - 1) // m) * m


# ---------------------------------------------------------------------------
# Shared BN-normalize -> fc1..fc4(+ReLU) -> fc5 -> tanh body.
# x: (tm, S) f32 tile. Weights bf16 (MXU), biases / elementwise math f32.
# ---------------------------------------------------------------------------
def _bn_mlp_body(x, mean, rstd, gamma_ref, beta_ref, w_refs, out_ref):
    f32, bf16 = jnp.float32, jnp.bfloat16
    w1, b1, w2, b2, w3, b3, w4, b4, w5, b5 = w_refs
    x = (x - mean) * rstd
    x = x * gamma_ref[...] + beta_ref[...]
    h = jnp.maximum(jnp.dot(x.astype(bf16), w1[...], preferred_element_type=f32) + b1[...], 0.0)
    h = jnp.maximum(jnp.dot(h.astype(bf16), w2[...], preferred_element_type=f32) + b2[...], 0.0)
    h = jnp.maximum(jnp.dot(h.astype(bf16), w3[...], preferred_element_type=f32) + b3[...], 0.0)
    h = jnp.maximum(jnp.dot(h.astype(bf16), w4[...], preferred_element_type=f32) + b4[...], 0.0)
    y = jnp.dot(h.astype(bf16), w5[...], preferred_element_type=f32) + b5[...]
    out_ref[...] = jnp.tanh(y).astype(out_ref.dtype)


def _make_fused_kernel(true_b, separate_full_state):
    """Single-launch kernel: BN batch statistics computed in-kernel.

    Zero-padded batch rows contribute zero to the sums, so dividing by the
    true (static) B gives exact training-mode BatchNorm1d statistics.  Stats
    are recomputed each grid step from the VMEM-resident state block, keeping
    every step independent (megacore "parallel"-safe)."""
    inv_b = 1.0 / float(true_b)

    def _stats_and_body(state_full_ref, state_ref, gamma_ref, beta_ref, w_refs, out_ref):
        xf = state_full_ref[...].astype(jnp.float32)
        mean = jnp.sum(xf, axis=0, keepdims=True) * inv_b
        ex2 = jnp.sum(xf * xf, axis=0, keepdims=True) * inv_b
        rstd = jax.lax.rsqrt(ex2 - mean * mean + 1e-5)
        x = xf if state_ref is state_full_ref else state_ref[...].astype(jnp.float32)
        _bn_mlp_body(x, mean, rstd, gamma_ref, beta_ref, w_refs, out_ref)

    if separate_full_state:
        def kernel(state_full_ref, state_ref, gamma_ref, beta_ref,
                   w1, b1, w2, b2, w3, b3, w4, b4, w5, b5, out_ref):
            _stats_and_body(state_full_ref, state_ref, gamma_ref, beta_ref,
                            (w1, b1, w2, b2, w3, b3, w4, b4, w5, b5), out_ref)
    else:
        def kernel(state_ref, gamma_ref, beta_ref,
                   w1, b1, w2, b2, w3, b3, w4, b4, w5, b5, out_ref):
            _stats_and_body(state_ref, state_ref, gamma_ref, beta_ref,
                            (w1, b1, w2, b2, w3, b3, w4, b4, w5, b5), out_ref)
    return kernel


# ---------------------------------------------------------------------------
# Fallback path (huge batches only): tiled accumulating stats kernel followed
# by the main MLP kernel that consumes mean/rstd as inputs.
# ---------------------------------------------------------------------------
def _make_stats_kernel(true_b):
    inv_b = 1.0 / float(true_b)

    def kernel(state_ref, mean_ref, rstd_ref, sum_sc, sq_sc):
        i = pl.program_id(0)

        @pl.when(i == 0)
        def _():
            sum_sc[...] = jnp.zeros_like(sum_sc)
            sq_sc[...] = jnp.zeros_like(sq_sc)

        x = state_ref[...].astype(jnp.float32)
        sum_sc[...] += jnp.sum(x, axis=0, keepdims=True)
        sq_sc[...] += jnp.sum(x * x, axis=0, keepdims=True)

        @pl.when(i == pl.num_programs(0) - 1)
        def _():
            mean = sum_sc[...] * inv_b
            var = sq_sc[...] * inv_b - mean * mean
            mean_ref[...] = mean
            rstd_ref[...] = jax.lax.rsqrt(var + 1e-5)

    return kernel


def _mlp_kernel(mean_ref, rstd_ref, gamma_ref, beta_ref, state_ref,
                w1, b1, w2, b2, w3, b3, w4, b4, w5, b5, out_ref):
    x = state_ref[...].astype(jnp.float32)
    _bn_mlp_body(x, mean_ref[...], rstd_ref[...], gamma_ref, beta_ref,
                 (w1, b1, w2, b2, w3, b3, w4, b4, w5, b5), out_ref)


def actor_forward(state, params, *, batch_tile=2048, out_dtype=jnp.float32,
                  fused_stats_budget=_FUSED_STATE_BUDGET):
    """state: (B, state_size) f32 -> (B, action_size) f32.

    Training-mode BatchNorm1d (batch statistics), matching the reference
    forward().  NOTE: B == 1 gives var == 0 (PyTorch would raise in training
    mode) -- guard upstream if that can occur."""
    B, S = state.shape
    action_size = params["action_size"]
    a_pad = params["w5"].shape[1]          # lane-padded action dim (128)

    # Tile selection: minimize batch padding (n tiles of tm rows each).
    batch_tile = max(8, min(int(batch_tile), 2048))
    n = pl.cdiv(B, batch_tile)
    tm = _round_up(pl.cdiv(B, n), 8)
    B_pad = n * tm
    state_pad = state if B_pad == B else jnp.pad(state, ((0, B_pad - B), (0, 0)))

    weight_args = (params["w1"], params["b1"], params["w2"], params["b2"],
                   params["w3"], params["b3"], params["w4"], params["b4"],
                   params["w5"], params["b5"])
    weight_bytes = sum(int(a.size) * a.dtype.itemsize for a in weight_args)

    def _resident(a):                      # constant index map -> DMA'd once
        return pl.BlockSpec(a.shape, lambda i: (0, 0))

    tile_spec = pl.BlockSpec((tm, S), lambda i: (i, 0))
    out_spec = pl.BlockSpec((tm, a_pad), lambda i: (i, 0))
    out_shape = jax.ShapeDtypeStruct((B_pad, a_pad), out_dtype)
    resident_specs = [_resident(a) for a in weight_args]

    fused = (n == 1) or (B_pad * S * 4 <= fused_stats_budget)
    out_bytes = jnp.dtype(out_dtype).itemsize

    # Explicit VMEM budget: double-buffered streamed tiles + resident blocks
    # + live f32 activations; capped at 32 MiB so v7x never regresses.
    est = (2 * tm * S * 4                      # state tile (double buffered)
           + 2 * tm * a_pad * out_bytes        # output tile (double buffered)
           + 2 * weight_bytes                  # resident weights / biases
           + (2 * B_pad * S * 4 if (fused and n > 1) else 4 * S * 4)
           + tm * 640 * 4                      # live f32 activations (~2.5 KB/row)
           + (2 << 20))                        # headroom
    vmem_limit = int(min(max(est * 1.3, 16 << 20), 32 << 20))

    # Megacore: shard the batch axis as soon as there are >= 2 tiles (v7x has
    # 2 TCs; the duplicated resident-weight DMA is ~180 KB bf16, i.e. noise).
    semantics = ("parallel",) if n >= 2 else ("arbitrary",)
    cparams = pltpu.CompilerParams(dimension_semantics=semantics,
                                   vmem_limit_bytes=vmem_limit)

    if fused:
        separate_full = n > 1
        state_specs = ([_resident(state_pad), tile_spec] if separate_full
                       else [tile_spec])
        state_args = (state_pad, state_pad) if separate_full else (state_pad,)
        out_pad = pl.pallas_call(
            _make_fused_kernel(B, separate_full),
            out_shape=out_shape,
            grid=(n,),
            in_specs=(state_specs
                      + [_resident(params["bn_gamma"]), _resident(params["bn_beta"])]
                      + resident_specs),
            out_specs=out_spec,
            compiler_params=cparams,
        )(*state_args, params["bn_gamma"], params["bn_beta"], *weight_args)
    else:
        # Huge-batch fallback: stats accumulated tile-by-tile (one pass,
        # sum + sum-of-squares), then the MLP kernel consumes mean/rstd.
        mean, rstd = pl.pallas_call(
            _make_stats_kernel(B),
            out_shape=(jax.ShapeDtypeStruct((1, S), jnp.float32),
                       jax.ShapeDtypeStruct((1, S), jnp.float32)),
            grid=(n,),
            in_specs=[tile_spec],
            out_specs=(pl.BlockSpec((1, S), lambda i: (0, 0)),
                       pl.BlockSpec((1, S), lambda i: (0, 0))),
            scratch_shapes=[pltpu.VMEM((1, S), jnp.float32),
                            pltpu.VMEM((1, S), jnp.float32)],
            compiler_params=pltpu.CompilerParams(
                dimension_semantics=("arbitrary",)),
        )(state_pad)
        out_pad = pl.pallas_call(
            _mlp_kernel,
            out_shape=out_shape,
            grid=(n,),
            in_specs=([_resident(mean), _resident(rstd),
                       _resident(params["bn_gamma"]), _resident(params["bn_beta"]),
                       tile_spec]
                      + resident_specs),
            out_specs=out_spec,
            compiler_params=cparams,
        )(mean, rstd, params["bn_gamma"], params["bn_beta"], state_pad, *weight_args)

    return out_pad[:B, :action_size].astype(jnp.float32)


def init_actor_params(key, state_size, action_size,
                      fc_units=256, fc_units1=128, fc_units2=128, fc_units3=64):
    """Parameter init mirroring Actor.__init__/reset_parameters.

    hidden_init uses weight.size()[0] == out_features as "fan_in" (the
    reference code's convention).  Weights are stored transposed (in, out),
    cast to bf16, and the narrow dims (fc_units3=64, action_size) are
    zero-padded to the 128 lane width (padding contributes exactly zero)."""
    dims = [(state_size, fc_units), (fc_units, fc_units1),
            (fc_units1, fc_units2), (fc_units2, fc_units3),
            (fc_units3, action_size)]
    keys = jax.random.split(key, 2 * len(dims))
    ws, bs = [], []
    for i, (d_in, d_out) in enumerate(dims):
        kw, kb = keys[2 * i], keys[2 * i + 1]
        lim = 1.0 / (d_out ** 0.5) if i < 4 else 0.003
        w = jax.random.uniform(kw, (d_in, d_out), jnp.float32, -lim, lim)
        # bias keeps PyTorch Linear default init: U(-1/sqrt(in), 1/sqrt(in))
        blim = 1.0 / (d_in ** 0.5)
        b = jax.random.uniform(kb, (1, d_out), jnp.float32, -blim, blim)
        ws.append(w)
        bs.append(b)

    h3p = _round_up(fc_units3, _LANE)
    a_pad = _round_up(action_size, _LANE)
    ws[3] = jnp.pad(ws[3], ((0, 0), (0, h3p - fc_units3)))
    bs[3] = jnp.pad(bs[3], ((0, 0), (0, h3p - fc_units3)))
    ws[4] = jnp.pad(ws[4], ((0, h3p - fc_units3), (0, a_pad - action_size)))
    bs[4] = jnp.pad(bs[4], ((0, 0), (0, a_pad - action_size)))

    params = {"action_size": action_size}
    for i in range(5):
        params[f"w{i + 1}"] = ws[i].astype(jnp.bfloat16)
        params[f"b{i + 1}"] = bs[i]  # biases stay f32
    params["bn_gamma"] = jnp.ones((1, state_size), jnp.float32)
    params["bn_beta"] = jnp.zeros((1, state_size), jnp.float32)
    return params


def _actor_reference(state, params):
    """Pure-JAX reference using the same (bf16-rounded) weights."""
    x = state.astype(jnp.float32)
    mean = jnp.mean(x, axis=0, keepdims=True)
    var = jnp.mean(jnp.square(x - mean), axis=0, keepdims=True)
    x = (x - mean) * jax.lax.rsqrt(var + 1e-5)
    x = x * params["bn_gamma"] + params["bn_beta"]
    h = x
    for i in range(1, 5):
        h = jnp.maximum(h @ params[f"w{i}"].astype(jnp.float32) + params[f"b{i}"], 0.0)
    y = h @ params["w5"].astype(jnp.float32) + params["b5"]
    return jnp.tanh(y)[:, :params["action_size"]]


if __name__ == "__main__":
    key = jax.random.PRNGKey(0)
    k_params, k_s1, k_s2 = jax.random.split(key, 3)

    state_size, action_size = 32, 4
    params = init_actor_params(k_params, state_size, action_size)

    # 1) Small batch: single fused launch, single tile.
    s1 = jax.random.normal(k_s1, (8, state_size), jnp.float32)
    o1 = actor_forward(s1, params)
    jax.block_until_ready(o1)
    r1 = _actor_reference(s1, params)
    assert o1.shape == (8, action_size)
    assert bool(jnp.all(jnp.isfinite(o1))) and bool(jnp.all(jnp.abs(o1) <= 1.0))
    assert bool(jnp.max(jnp.abs(o1 - r1)) < 5e-2)

    # 2) Non-tile-aligned batch with the default tile: still ONE fused launch
    #    (264-row tile, only 4 padded rows), global BN stats on the true batch.
    s2 = jax.random.normal(k_s2, (260, state_size), jnp.float32)
    r2 = _actor_reference(s2, params)
    o2 = actor_forward(s2, params)
    jax.block_until_ready(o2)
    assert o2.shape == (260, action_size)
    assert bool(jnp.all(jnp.isfinite(o2)))
    assert bool(jnp.max(jnp.abs(o2 - r2)) < 5e-2)

    # 3) Forced multi-tile fused path (3 tiles, megacore-parallel batch axis,
    #    stats recomputed from the resident full-state block).
    o3 = actor_forward(s2, params, batch_tile=96)
    jax.block_until_ready(o3)
    assert bool(jnp.max(jnp.abs(o3 - r2)) < 5e-2)

    # 4) Forced two-pass fallback (tiled accumulating BN-stats kernel).
    o4 = actor_forward(s2, params, batch_tile=96, fused_stats_budget=0)
    jax.block_until_ready(o4)
    assert bool(jnp.max(jnp.abs(o4 - r2)) < 5e-2)

    # 5) bf16 output store (halves the lane-padded HBM write stream).
    o5 = actor_forward(s2, params, out_dtype=jnp.bfloat16)
    jax.block_until_ready(o5)
    assert bool(jnp.max(jnp.abs(o5 - r2)) < 5e-2)

    print("KERNEL_OK")
</pallas_src>

<mosaic_0001>
module attributes {stable_mosaic.version = 11 : i64} {
  func.func @kernel(%arg0: i32, %arg1: memref<8x32xf32, #tpu.memory_space<vmem>>, %arg2: memref<1x32xf32, #tpu.memory_space<vmem>>, %arg3: memref<1x32xf32, #tpu.memory_space<vmem>>, %arg4: memref<32x256xbf16, #tpu.memory_space<vmem>>, %arg5: memref<1x256xf32, #tpu.memory_space<vmem>>, %arg6: memref<256x128xbf16, #tpu.memory_space<vmem>>, %arg7: memref<1x128xf32, #tpu.memory_space<vmem>>, %arg8: memref<128x128xbf16, #tpu.memory_space<vmem>>, %arg9: memref<1x128xf32, #tpu.memory_space<vmem>>, %arg10: memref<128x128xbf16, #tpu.memory_space<vmem>>, %arg11: memref<1x128xf32, #tpu.memory_space<vmem>>, %arg12: memref<128x128xbf16, #tpu.memory_space<vmem>>, %arg13: memref<1x128xf32, #tpu.memory_space<vmem>>, %arg14: memref<8x128xf32, #tpu.memory_space<vmem>>) attributes {dimension_semantics = [#tpu.dimension_semantics<arbitrary>], iteration_bounds = array<i64: 1>, scalar_prefetch = 0 : i64, scratch_operands = 0 : i64, tpu.core_type = #tpu.core_type<tc>, window_params = [{transform_indices = @transform_0, window_bounds = array<i64: 8, 32>}, {pipeline_mode = #tpu.pipeline_mode<synchronous>, transform_indices = @transform_1, window_bounds = array<i64: 1, 32>}, {pipeline_mode = #tpu.pipeline_mode<synchronous>, transform_indices = @transform_2, window_bounds = array<i64: 1, 32>}, {pipeline_mode = #tpu.pipeline_mode<synchronous>, transform_indices = @transform_3, window_bounds = array<i64: 32, 256>}, {pipeline_mode = #tpu.pipeline_mode<synchronous>, transform_indices = @transform_4, window_bounds = array<i64: 1, 256>}, {pipeline_mode = #tpu.pipeline_mode<synchronous>, transform_indices = @transform_5, window_bounds = array<i64: 256, 128>}, {pipeline_mode = #tpu.pipeline_mode<synchronous>, transform_indices = @transform_6, window_bounds = array<i64: 1, 128>}, {pipeline_mode = #tpu.pipeline_mode<synchronous>, transform_indices = @transform_7, window_bounds = array<i64: 128, 128>}, {pipeline_mode = #tpu.pipeline_mode<synchronous>, transform_indices = @transform_8, window_bounds = array<i64: 1, 128>}, {pipeline_mode = #tpu.pipeline_mode<synchronous>, transform_indices = @transform_9, window_bounds = array<i64: 128, 128>}, {pipeline_mode = #tpu.pipeline_mode<synchronous>, transform_indices = @transform_10, window_bounds = array<i64: 1, 128>}, {pipeline_mode = #tpu.pipeline_mode<synchronous>, transform_indices = @transform_11, window_bounds = array<i64: 128, 128>}, {pipeline_mode = #tpu.pipeline_mode<synchronous>, transform_indices = @transform_12, window_bounds = array<i64: 1, 128>}, {transform_indices = @transform_13, window_bounds = array<i64: 8, 128>}]} {
    %c0 = arith.constant 0 : index
    %c0_0 = arith.constant 0 : index
    %0 = vector.load %arg1[%c0, %c0_0] : memref<8x32xf32, #tpu.memory_space<vmem>>, vector<8x32xf32>
    %cst = arith.constant dense<0.000000e+00> : vector<32xf32>
    %1 = vector.multi_reduction <add>, %0, %cst [0] : vector<8x32xf32> to vector<32xf32>
    %2 = vector.shape_cast %1 : vector<32xf32> to vector<1x32xf32>
    %cst_1 = arith.constant 1.250000e-01 : f32
    %3 = vector.broadcast %cst_1 : f32 to vector<1x32xf32>
    %4 = arith.mulf %2, %3 : vector<1x32xf32>
    %5 = arith.mulf %0, %0 : vector<8x32xf32>
    %cst_2 = arith.constant dense<0.000000e+00> : vector<32xf32>
    %6 = vector.multi_reduction <add>, %5, %cst_2 [0] : vector<8x32xf32> to vector<32xf32>
    %7 = vector.shape_cast %6 : vector<32xf32> to vector<1x32xf32>
    %cst_3 = arith.constant 1.250000e-01 : f32
    %8 = vector.broadcast %cst_3 : f32 to vector<1x32xf32>
    %9 = arith.mulf %7, %8 : vector<1x32xf32>
    %10 = arith.mulf %4, %4 : vector<1x32xf32>
    %11 = arith.subf %9, %10 : vector<1x32xf32>
    %cst_4 = arith.constant 9.99999974E-6 : f32
    %12 = vector.broadcast %cst_4 : f32 to vector<1x32xf32>
    %13 = arith.addf %11, %12 : vector<1x32xf32>
    %14 = math.rsqrt %13 : vector<1x32xf32>
    %15 = vector.broadcast %4 : vector<1x32xf32> to vector<8x32xf32>
    %16 = arith.subf %0, %15 : vector<8x32xf32>
    %17 = vector.broadcast %14 : vector<1x32xf32> to vector<8x32xf32>
    %18 = arith.mulf %16, %17 : vector<8x32xf32>
    %c0_5 = arith.constant 0 : index
    %c0_6 = arith.constant 0 : index
    %19 = vector.load %arg2[%c0_5, %c0_6] : memref<1x32xf32, #tpu.memory_space<vmem>>, vector<1x32xf32>
    %20 = vector.broadcast %19 : vector<1x32xf32> to vector<8x32xf32>
    %21 = arith.mulf %18, %20 : vector<8x32xf32>
    %c0_7 = arith.constant 0 : index
    %c0_8 = arith.constant 0 : index
    %22 = vector.load %arg3[%c0_7, %c0_8] : memref<1x32xf32, #tpu.memory_space<vmem>>, vector<1x32xf32>
    %23 = vector.broadcast %22 : vector<1x32xf32> to vector<8x32xf32>
    %24 = arith.addf %21, %23 : vector<8x32xf32>
    %25 = arith.truncf %24 : vector<8x32xf32> to vector<8x32xbf16>
    %c0_9 = arith.constant 0 : index
    %c0_10 = arith.constant 0 : index
    %26 = vector.load %arg4[%c0_9, %c0_10] : memref<32x256xbf16, #tpu.memory_space<vmem>>, vector<32x256xbf16>
    %cst_11 = arith.constant dense<0.000000e+00> : vector<8x256xf32>
    %27 = tpu.matmul %25, %26, %cst_11 {dimension_numbers = #tpu.dot_dimension_numbers<[1], [0], [0], [1], [0, 0, 1, 1], [], []>} : vector<8x32xbf16>, vector<32x256xbf16>, vector<8x256xf32> -> vector<8x256xf32>
    %c0_12 = arith.constant 0 : index
    %c0_13 = arith.constant 0 : index
    %28 = vector.load %arg5[%c0_12, %c0_13] : memref<1x256xf32, #tpu.memory_space<vmem>>, vector<1x256xf32>
    %29 = vector.broadcast %28 : vector<1x256xf32> to vector<8x256xf32>
    %30 = arith.addf %27, %29 : vector<8x256xf32>
    %cst_14 = arith.constant 0.000000e+00 : f32
    %31 = vector.broadcast %cst_14 : f32 to vector<8x256xf32>
    %32 = arith.maximumf %30, %31 : vector<8x256xf32>
    %33 = arith.truncf %32 : vector<8x256xf32> to vector<8x256xbf16>
    %c0_15 = arith.constant 0 : index
    %c0_16 = arith.constant 0 : index
    %34 = vector.load %arg6[%c0_15, %c0_16] : memref<256x128xbf16, #tpu.memory_space<vmem>>, vector<256x128xbf16>
    %cst_17 = arith.constant dense<0.000000e+00> : vector<8x128xf32>
    %35 = tpu.matmul %33, %34, %cst_17 {dimension_numbers = #tpu.dot_dimension_numbers<[1], [0], [0], [1], [0, 0, 1, 1], [], []>} : vector<8x256xbf16>, vector<256x128xbf16>, vector<8x128xf32> -> vector<8x128xf32>
    %c0_18 = arith.constant 0 : index
    %c0_19 = arith.constant 0 : index
    %36 = vector.load %arg7[%c0_18, %c0_19] : memref<1x128xf32, #tpu.memory_space<vmem>>, vector<1x128xf32>
    %37 = vector.broadcast %36 : vector<1x128xf32> to vector<8x128xf32>
    %38 = arith.addf %35, %37 : vector<8x128xf32>
    %cst_20 = arith.constant 0.000000e+00 : f32
    %39 = vector.broadcast %cst_20 : f32 to vector<8x128xf32>
    %40 = arith.maximumf %38, %39 : vector<8x128xf32>
    %41 = arith.truncf %40 : vector<8x128xf32> to vector<8x128xbf16>
    %c0_21 = arith.constant 0 : index
    %c0_22 = arith.constant 0 : index
    %42 = vector.load %arg8[%c0_21, %c0_22] : memref<128x128xbf16, #tpu.memory_space<vmem>>, vector<128x128xbf16>
    %cst_23 = arith.constant dense<0.000000e+00> : vector<8x128xf32>
    %43 = tpu.matmul %41, %42, %cst_23 {dimension_numbers = #tpu.dot_dimension_numbers<[1], [0], [0], [1], [0, 0, 1, 1], [], []>} : vector<8x128xbf16>, vector<128x128xbf16>, vector<8x128xf32> -> vector<8x128xf32>
    %c0_24 = arith.constant 0 : index
    %c0_25 = arith.constant 0 : index
    %44 = vector.load %arg9[%c0_24, %c0_25] : memref<1x128xf32, #tpu.memory_space<vmem>>, vector<1x128xf32>
    %45 = vector.broadcast %44 : vector<1x128xf32> to vector<8x128xf32>
    %46 = arith.addf %43, %45 : vector<8x128xf32>
    %cst_26 = arith.constant 0.000000e+00 : f32
    %47 = vector.broadcast %cst_26 : f32 to vector<8x128xf32>
    %48 = arith.maximumf %46, %47 : vector<8x128xf32>
    %49 = arith.truncf %48 : vector<8x128xf32> to vector<8x128xbf16>
    %c0_27 = arith.constant 0 : index
    %c0_28 = arith.constant 0 : index
    %50 = vector.load %arg10[%c0_27, %c0_28] : memref<128x128xbf16, #tpu.memory_space<vmem>>, vector<128x128xbf16>
    %cst_29 = arith.constant dense<0.000000e+00> : vector<8x128xf32>
    %51 = tpu.matmul %49, %50, %cst_29 {dimension_numbers = #tpu.dot_dimension_numbers<[1], [0], [0], [1], [0, 0, 1, 1], [], []>} : vector<8x128xbf16>, vector<128x128xbf16>, vector<8x128xf32> -> vector<8x128xf32>
    %c0_30 = arith.constant 0 : index
    %c0_31 = arith.constant 0 : index
    %52 = vector.load %arg11[%c0_30, %c0_31] : memref<1x128xf32, #tpu.memory_space<vmem>>, vector<1x128xf32>
    %53 = vector.broadcast %52 : vector<1x128xf32> to vector<8x128xf32>
    %54 = arith.addf %51, %53 : vector<8x128xf32>
    %cst_32 = arith.constant 0.000000e+00 : f32
    %55 = vector.broadcast %cst_32 : f32 to vector<8x128xf32>
    %56 = arith.maximumf %54, %55 : vector<8x128xf32>
    %57 = arith.truncf %56 : vector<8x128xf32> to vector<8x128xbf16>
    %c0_33 = arith.constant 0 : index
    %c0_34 = arith.constant 0 : index
    %58 = vector.load %arg12[%c0_33, %c0_34] : memref<128x128xbf16, #tpu.memory_space<vmem>>, vector<128x128xbf16>
    %cst_35 = arith.constant dense<0.000000e+00> : vector<8x128xf32>
    %59 = tpu.matmul %57, %58, %cst_35 {dimension_numbers = #tpu.dot_dimension_numbers<[1], [0], [0], [1], [0, 0, 1, 1], [], []>} : vector<8x128xbf16>, vector<128x128xbf16>, vector<8x128xf32> -> vector<8x128xf32>
    %c0_36 = arith.constant 0 : index
    %c0_37 = arith.constant 0 : index
    %60 = vector.load %arg13[%c0_36, %c0_37] : memref<1x128xf32, #tpu.memory_space<vmem>>, vector<1x128xf32>
    %61 = vector.broadcast %60 : vector<1x128xf32> to vector<8x128xf32>
    %62 = arith.addf %59, %61 : vector<8x128xf32>
    %63 = math.tanh %62 : vector<8x128xf32>
    %c0_38 = arith.constant 0 : index
    %c0_39 = arith.constant 0 : index
    %64 = vector.load %arg14[%c0_38, %c0_39] : memref<8x128xf32, #tpu.memory_space<vmem>>, vector<8x128xf32>
    tpu.vector_store %arg14[%c0_38, %c0_39], %63 {strides = array<i32>} : memref<8x128xf32, #tpu.memory_space<vmem>>, vector<8x128xf32>,
    return
  }
  func.func @transform_0(%arg0: i32) -> (i32, i32) {
    %c0_i32 = arith.constant 0 : i32
    %c0_i32_0 = arith.constant 0 : i32
    return %arg0, %c0_i32 : i32, i32
  }
  func.func @transform_1(%arg0: i32) -> (i32, i32) {
    %c0_i32 = arith.constant 0 : i32
    %c0_i32_0 = arith.constant 0 : i32
    %c0_i32_1 = arith.constant 0 : i32
    return %c0_i32, %c0_i32_0 : i32, i32
  }
  func.func @transform_2(%arg0: i32) -> (i32, i32) {
    %c0_i32 = arith.constant 0 : i32
    %c0_i32_0 = arith.constant 0 : i32
    %c0_i32_1 = arith.constant 0 : i32
    return %c0_i32, %c0_i32_0 : i32, i32
  }
  func.func @transform_3(%arg0: i32) -> (i32, i32) {
    %c0_i32 = arith.constant 0 : i32
    %c0_i32_0 = arith.constant 0 : i32
    %c0_i32_1 = arith.constant 0 : i32
    return %c0_i32, %c0_i32_0 : i32, i32
  }
  func.func @transform_4(%arg0: i32) -> (i32, i32) {
    %c0_i32 = arith.constant 0 : i32
    %c0_i32_0 = arith.constant 0 : i32
    %c0_i32_1 = arith.constant 0 : i32
    return %c0_i32, %c0_i32_0 : i32, i32
  }
  func.func @transform_5(%arg0: i32) -> (i32, i32) {
    %c0_i32 = arith.constant 0 : i32
    %c0_i32_0 = arith.constant 0 : i32
    %c0_i32_1 = arith.constant 0 : i32
    return %c0_i32, %c0_i32_0 : i32, i32
  }
  func.func @transform_6(%arg0: i32) -> (i32, i32) {
    %c0_i32 = arith.constant 0 : i32
    %c0_i32_0 = arith.constant 0 : i32
    %c0_i32_1 = arith.constant 0 : i32
    return %c0_i32, %c0_i32_0 : i32, i32
  }
  func.func @transform_7(%arg0: i32) -> (i32, i32) {
    %c0_i32 = arith.constant 0 : i32
    %c0_i32_0 = arith.constant 0 : i32
    %c0_i32_1 = arith.constant 0 : i32
    return %c0_i32, %c0_i32_0 : i32, i32
  }
  func.func @transform_8(%arg0: i32) -> (i32, i32) {
    %c0_i32 = arith.constant 0 : i32
    %c0_i32_0 = arith.constant 0 : i32
    %c0_i32_1 = arith.constant 0 : i32
    return %c0_i32, %c0_i32_0 : i32, i32
  }
  func.func @transform_9(%arg0: i32) -> (i32, i32) {
    %c0_i32 = arith.constant 0 : i32
    %c0_i32_0 = arith.constant 0 : i32
    %c0_i32_1 = arith.constant 0 : i32
    return %c0_i32, %c0_i32_0 : i32, i32
  }
  func.func @transform_10(%arg0: i32) -> (i32, i32) {
    %c0_i32 = arith.constant 0 : i32
    %c0_i32_0 = arith.constant 0 : i32
    %c0_i32_1 = arith.constant 0 : i32
    return %c0_i32, %c0_i32_0 : i32, i32
  }
  func.func @transform_11(%arg0: i32) -> (i32, i32) {
    %c0_i32 = arith.constant 0 : i32
    %c0_i32_0 = arith.constant 0 : i32
    %c0_i32_1 = arith.constant 0 : i32
    return %c0_i32, %c0_i32_0 : i32, i32
  }
  func.func @transform_12(%arg0: i32) -> (i32, i32) {
    %c0_i32 = arith.constant 0 : i32
    %c0_i32_0 = arith.constant 0 : i32
    %c0_i32_1 = arith.constant 0 : i32
    return %c0_i32, %c0_i32_0 : i32, i32
  }
  func.func @transform_13(%arg0: i32) -> (i32, i32) {
    %c0_i32 = arith.constant 0 : i32
    %c0_i32_0 = arith.constant 0 : i32
    return %arg0, %c0_i32 : i32, i32
  }
}

</mosaic_0001>

<llo_original>
// kernel: tpu_custom_call.1
$region0: #{tpu_custom_call.1}
  #allocation0 [shape = 'u32[]', space=smem, size = 0x4, offset = 0x4, fixed_abs, tag = 'smem constant byte address 0x4 - core index']
  #allocation1 [shape = 'u32[144,128]{1,0:T(1,128)}', space=vmem, size = 0x12000, scoped, tag = 'internal scratch']
  %s0 = inlined_call_operand.hbm [shape: f32[8,32], index: 0, kind: input, shape index: {}]
  %s1 = inlined_call_operand.vmem [shape: f32[1,32], index: 1, kind: input, shape index: {}]
  %s2 = inlined_call_operand.vmem [shape: f32[1,32], index: 2, kind: input, shape index: {}]
  %s3 = inlined_call_operand.hbm [shape: bf16[32,256], index: 3, kind: input, shape index: {}]
  %s4 = inlined_call_operand.vmem [shape: f32[1,256], index: 4, kind: input, shape index: {}]
  %s5 = inlined_call_operand.hbm [shape: bf16[256,128], index: 5, kind: input, shape index: {}]
  %s6 = inlined_call_operand.vmem [shape: f32[1,128], index: 6, kind: input, shape index: {}]
  %s7 = inlined_call_operand.hbm [shape: bf16[128,128], index: 7, kind: input, shape index: {}]
  %s8 = inlined_call_operand.vmem [shape: f32[1,128], index: 8, kind: input, shape index: {}]
  %s9 = inlined_call_operand.hbm [shape: bf16[128,128], index: 9, kind: input, shape index: {}]
  %s10 = inlined_call_operand.vmem [shape: f32[1,128], index: 10, kind: input, shape index: {}]
  %s11 = inlined_call_operand.hbm [shape: bf16[128,128], index: 11, kind: input, shape index: {}]
  %s12 = inlined_call_operand.vmem [shape: f32[1,128], index: 12, kind: input, shape index: {}]
  %s13 = inlined_call_operand.hbm [shape: f32[8,128], index: 13, kind: output, shape index: {}]
  %s14 = sld [smem:[#allocation0]]
  $region86: #{tpu_custom_call.1} parent=0
    _
  %s16 = ssub.s32 1, %s14
  %s17 = scalar_select 0, %s16, %s14
  $region1: #{tpu_custom_call.1} parent=0
    #allocation2 [shape = 'u8[4096]{0}', space=vmem, size = 0x1000, scoped, tag = 'input window, operand 0, single buffered']
    #allocation3 [shape = 's32[1]{0}', space=sflag, size = 0x4, scoped, tag = 'scoped memory for tpu_custom_call.1']
    #allocation4 [shape = 's32[1]{0}', space=sflag, size = 0x4, scoped, tag = 'scoped memory for tpu_custom_call.1']
    #allocation5 [shape = 'u8[16384]{0}', space=vmem, size = 0x4000, scoped, tag = 'input window, operand 3, single buffered']
    #allocation6 [shape = 's32[1]{0}', space=sflag, size = 0x4, scoped, tag = 'scoped memory for tpu_custom_call.1']
    #allocation7 [shape = 'u8[65536]{0}', space=vmem, size = 0x10000, scoped, tag = 'input window, operand 5, single buffered']
    #allocation8 [shape = 'u8[32768]{0}', space=vmem, size = 0x8000, scoped, tag = 'input window, operand 7, single buffered']
    #allocation9 [shape = 's32[1]{0}', space=sflag, size = 0x4, scoped, tag = 'scoped memory for tpu_custom_call.1']
    #allocation10 [shape = 'u8[32768]{0}', space=vmem, size = 0x8000, scoped, tag = 'input window, operand 9, single buffered']
    #allocation11 [shape = 'u8[32768]{0}', space=vmem, size = 0x8000, scoped, tag = 'input window, operand 11, single buffered']
    #allocation12 [shape = 's32[1]{0}', space=sflag, size = 0x4, scoped, tag = 'scoped memory for tpu_custom_call.1']
    #allocation13 [shape = 'u8[4096]{0}', space=vmem, size = 0x1000, scoped, tag = 'output window, operand 0, single buffered']
    %18 = vsyncpa [#allocation3], 0
    %19 = vsyncpa [#allocation6], 0
    %20 = vsyncpa [#allocation9], 0
    %21 = vsyncpa [#allocation12], 0
    %22 = vsyncpa [#allocation4], 0
    // Predicated region
    $region2: #{tpu_custom_call.1} parent=1 // pred_check
      _
    $region3: #{tpu_custom_call.1} parent=1 // pred_check_branch
      %24 = sbr.rel (0) target = $region5
    $region4: #{tpu_custom_call.1} parent=1 // pred_region
      %s26 = ssub.s32 128, 128
      %27 = vsyncadd [#allocation3], %s26
      %s29 = sshll.u32 [#allocation2], 4
      %s30 = int_to_ptr.vmem [resolvable:$true] %s29
      %32 = dma.hbm_to_vmem [thread:$0]  %s0, 128, %s30, [#allocation3]
    $region5: #{tpu_custom_call.1} parent=1 // pred_fallthru
      _
    // Predicated region
    $region6: #{tpu_custom_call.1} parent=1 // pred_check
      _
    $region7: #{tpu_custom_call.1} parent=1 // pred_check_branch
      %34 = sbr.rel (0) target = $region9
    $region8: #{tpu_custom_call.1} parent=1 // pred_region
      _
    $region9: #{tpu_custom_call.1} parent=1 // pred_fallthru
      _
    // Predicated region
    $region10: #{tpu_custom_call.1} parent=1 // pred_check
      _
    $region11: #{tpu_custom_call.1} parent=1 // pred_check_branch
      %36 = sbr.rel (0) target = $region13
    $region12: #{tpu_custom_call.1} parent=1 // pred_region
      _
    $region13: #{tpu_custom_call.1} parent=1 // pred_fallthru
      _
    // Predicated region
    $region14: #{tpu_custom_call.1} parent=1 // pred_check
      _
    $region15: #{tpu_custom_call.1} parent=1 // pred_check_branch
      %38 = sbr.rel (0) target = $region17
    $region16: #{tpu_custom_call.1} parent=1 // pred_region
      %s40 = ssub.s32 512, 512
      %41 = vsyncadd [#allocation6], %s40
      %s42 = sshll.u32 [#allocation5], 4
      %s43 = int_to_ptr.vmem [resolvable:$true] %s42
      %48 = dma.hbm_to_vmem [thread:$0]  %s3, 512, %s43, [#allocation6], 128, 128, 8
    $region17: #{tpu_custom_call.1} parent=1 // pred_fallthru
      _
    // Predicated region
    $region18: #{tpu_custom_call.1} parent=1 // pred_check
      _
    $region19: #{tpu_custom_call.1} parent=1 // pred_check_branch
      %50 = sbr.rel (0) target = $region21
    $region20: #{tpu_custom_call.1} parent=1 // pred_region
      _
    $region21: #{tpu_custom_call.1} parent=1 // pred_fallthru
      _
    // Predicated region
    $region22: #{tpu_custom_call.1} parent=1 // pred_check
      _
    $region23: #{tpu_custom_call.1} parent=1 // pred_check_branch
      %52 = sbr.rel (0) target = $region25
    $region24: #{tpu_custom_call.1} parent=1 // pred_region
      %s54 = ssub.s32 2048, 2048
      %55 = vsyncadd [#allocation6], %s54
      %s56 = sshll.u32 [#allocation7], 4
      %s57 = int_to_ptr.vmem [resolvable:$true] %s56
      %62 = dma.hbm_to_vmem [thread:$0]  %s5, 2048, %s57, [#allocation6], 64, 64, 4
    $region25: #{tpu_custom_call.1} parent=1 // pred_fallthru
      _
    // Predicated region
    $region26: #{tpu_custom_call.1} parent=1 // pred_check
      _
    $region27: #{tpu_custom_call.1} parent=1 // pred_check_branch
      %64 = sbr.rel (0) target = $region29
    $region28: #{tpu_custom_call.1} parent=1 // pred_region
      _
    $region29: #{tpu_custom_call.1} parent=1 // pred_fallthru
      _
    // Predicated region
    $region30: #{tpu_custom_call.1} parent=1 // pred_check
      _
    $region31: #{tpu_custom_call.1} parent=1 // pred_check_branch
      %66 = sbr.rel (0) target = $region33
    $region32: #{tpu_custom_call.1} parent=1 // pred_region
      %s68 = ssub.s32 1024, 1024
      %69 = vsyncadd [#allocation9], %s68
      %s70 = sshll.u32 [#allocation8], 4
      %s71 = int_to_ptr.vmem [resolvable:$true] %s70
      %76 = dma.hbm_to_vmem [thread:$0]  %s7, 1024, %s71, [#allocation9], 64, 64, 4
    $region33: #{tpu_custom_call.1} parent=1 // pred_fallthru
      _
    // Predicated region
    $region34: #{tpu_custom_call.1} parent=1 // pred_check
      _
    $region35: #{tpu_custom_call.1} parent=1 // pred_check_branch
      %78 = sbr.rel (0) target = $region37
    $region36: #{tpu_custom_call.1} parent=1 // pred_region
      _
    $region37: #{tpu_custom_call.1} parent=1 // pred_fallthru
      _
    // Predicated region
    $region38: #{tpu_custom_call.1} parent=1 // pred_check
      _
    $region39: #{tpu_custom_call.1} parent=1 // pred_check_branch
      %80 = sbr.rel (0) target = $region41
    $region40: #{tpu_custom_call.1} parent=1 // pred_region
      %s82 = ssub.s32 1024, 1024
      %83 = vsyncadd [#allocation9], %s82
      %s84 = sshll.u32 [#allocation10], 4
      %s85 = int_to_ptr.vmem [resolvable:$true] %s84
      %90 = dma.hbm_to_vmem [thread:$0]  %s9, 1024, %s85, [#allocation9], 64, 64, 4
    $region41: #{tpu_custom_call.1} parent=1 // pred_fallthru
      _
    // Predicated region
    $region42: #{tpu_custom_call.1} parent=1 // pred_check
      _
    $region43: #{tpu_custom_call.1} parent=1 // pred_check_branch
      %92 = sbr.rel (0) target = $region45
    $region44: #{tpu_custom_call.1} parent=1 // pred_region
      _
    $region45: #{tpu_custom_call.1} parent=1 // pred_fallthru
      _
    // Predicated region
    $region46: #{tpu_custom_call.1} parent=1 // pred_check
      _
    $region47: #{tpu_custom_call.1} parent=1 // pred_check_branch
      %94 = sbr.rel (0) target = $region49
    $region48: #{tpu_custom_call.1} parent=1 // pred_region
      %s96 = ssub.s32 1024, 1024
      %97 = vsyncadd [#allocation12], %s96
      %s98 = sshll.u32 [#allocation11], 4
      %s99 = int_to_ptr.vmem [resolvable:$true] %s98
      %104 = dma.hbm_to_vmem [thread:$0]  %s11, 1024, %s99, [#allocation12], 64, 64, 4
    $region49: #{tpu_custom_call.1} parent=1 // pred_fallthru
      _
    // Predicated region
    $region50: #{tpu_custom_call.1} parent=1 // pred_check
      _
    $region51: #{tpu_custom_call.1} parent=1 // pred_check_branch
      %106 = sbr.rel (0) target = $region53
    $region52: #{tpu_custom_call.1} parent=1 // pred_region
      _
    $region53: #{tpu_custom_call.1} parent=1 // pred_fallthru
      _
    // Predicated region
    $region54: #{tpu_custom_call.1} parent=1 // pred_check
      _
    $region55: #{tpu_custom_call.1} parent=1 // pred_check_branch
      %108 = sbr.rel (0) target = $region57
    $region56: #{tpu_custom_call.1} parent=1 // pred_region
      %109 = dma.done [#allocation3], 128
    $region57: #{tpu_custom_call.1} parent=1 // pred_fallthru
      _
    // Predicated region
    $region58: #{tpu_custom_call.1} parent=1 // pred_check
      _
    $region59: #{tpu_custom_call.1} parent=1 // pred_check_branch
      %111 = sbr.rel (0) target = $region61
    $region60: #{tpu_custom_call.1} parent=1 // pred_region
      %112 = dma.done [#allocation6], 512
    $region61: #{tpu_custom_call.1} parent=1 // pred_fallthru
      _
    // Predicated region
    $region62: #{tpu_custom_call.1} parent=1 // pred_check
      _
    $region63: #{tpu_custom_call.1} parent=1 // pred_check_branch
      %114 = sbr.rel (0) target = $region65
    $region64: #{tpu_custom_call.1} parent=1 // pred_region
      %115 = dma.done [#allocation6], 2048
    $region65: #{tpu_custom_call.1} parent=1 // pred_fallthru
      _
    // Predicated region
    $region66: #{tpu_custom_call.1} parent=1 // pred_check
      _
    $region67: #{tpu_custom_call.1} parent=1 // pred_check_branch
      %117 = sbr.rel (0) target = $region69
    $region68: #{tpu_custom_call.1} parent=1 // pred_region
      %118 = dma.done [#allocation9], 1024
    $region69: #{tpu_custom_call.1} parent=1 // pred_fallthru
      _
    // Predicated region
    $region70: #{tpu_custom_call.1} parent=1 // pred_check
      _
    $region71: #{tpu_custom_call.1} parent=1 // pred_check_branch
      %120 = sbr.rel (0) target = $region73
    $region72: #{tpu_custom_call.1} parent=1 // pred_region
      %121 = dma.done [#allocation9], 1024
    $region73: #{tpu_custom_call.1} parent=1 // pred_fallthru
      _
    // Predicated region
    $region74: #{tpu_custom_call.1} parent=1 // pred_check
      _
    $region75: #{tpu_custom_call.1} parent=1 // pred_check_branch
      %123 = sbr.rel (0) target = $region77
    $region76: #{tpu_custom_call.1} parent=1 // pred_region
      %124 = dma.done [#allocation12], 1024
    $region77: #{tpu_custom_call.1} parent=1 // pred_fallthru
      _
    %v126 = vld [vmem:[#allocation2] sm:$0xff]
    %vm127 = vcmask 261120
    %v128 = vsel %vm127, %v126, 0.0
    %v129 = vrot.slane %v128, 4
    %v130 = vadd.f32 %v128, %v129
    %v131 = vrot.slane %v130, 2
    %v132 = vadd.f32 %v130, %v131
    %v133 = vrot.slane %v132, 1
    %v134 = vadd.f32 %v132, %v133
    %v135 = vmul.f32 %v134, 0.125
    %v136 = vmul.f32 %v126, %v126
    %v137 = vsel %vm127, %v136, 0.0
    %v138 = vrot.slane %v137, 4
    %v139 = vadd.f32 %v137, %v138
    %v140 = vrot.slane %v139, 2
    %v141 = vadd.f32 %v139, %v140
    %v142 = vrot.slane %v141, 1
    %v143 = vadd.f32 %v141, %v142
    %v144 = vmul.f32 %v143, 0.125
    %v145 = vmul.f32 %v135, %v135
    %v146 = vsub.f32 %v144, %v145
    %v147 = vadd.f32 %v146, 1e-05
    %v148 = vrsqrt.pop %v147
    %v149 = vsub.f32 %v126, %v135
    %v150 = vmul.f32 %v149, %v148
    %v151 = vld [vmem:[%s1] sm:$0x1]
    %v153 = vlaneseq
    %v154 = vshrl.u32 %v153, 7
    %v155 = vsub.s32 0, %v154
    %v156 = vrot.slane %v151, %v155
    %v158 = vmul.f32 %v150, %v156
    %v159 = vld [vmem:[%s2] sm:$0x1]
    %v161 = vlaneseq
    %v162 = vshrl.u32 %v161, 7
    %v163 = vsub.s32 0, %v162
    %v164 = vrot.slane %v159, %v163
    %v166 = vadd.f32 %v158, %v164
    %v167 = vpack.c.bf16 %v166, %v166
    %v168 = vld [vmem:[#allocation5] sm:$0xff]
    %v169 = vld [vmem:[#allocation5 + $0x8] sm:$0xff]
    %v170 = vld [vmem:[#allocation5 + $0x10] sm:$0xff]
    %v171 = vld [vmem:[#allocation5 + $0x18] sm:$0xff]
    %v172 = vld [vmem:[%s4] sm:$0x3]
    %v174 = vlaneseq
    %v175 = vshrl.u32 %v174, 7
    %v176 = vsub.s32 0, %v175
    %v177 = vrot.slane %v172, %v176
    %v178 = vlaneseq
    %v179 = vshrl.u32 %v178, 7
    %v180 = vsub.s32 1, %v179
    %v181 = vrot.slane %v172, %v180
    %v188 = vunpack.c.l.b16 %v168
    %v189 = vunpack.c.h.b16 %v168
    %v190 = vunpack.c.l.b16 %v169
    %v191 = vunpack.c.h.b16 %v169
    %v192 = vunpack.c.l.b16 %v170
    %v193 = vunpack.c.h.b16 %v170
    %v194 = vunpack.c.l.b16 %v171
    %v195 = vunpack.c.h.b16 %v171
    %v196 = vpack.c.b16 %v190, %v188
    %v197 = vpack.c.b16 %v191, %v189
    %v198 = vpack.c.b16 %v194, %v192
    %v199 = vpack.c.b16 %v195, %v193
    %v205 = vsel %vm127, %v167, 0
    %207 = vmatprep.subr.bf16.mxu0 %v197
    %208 = vmatpush1.bf16.msra.mxu0 %v196
    %209 = vmatprep.subr.bf16.mxu0 %v199
    %210 = vmatpush1.bf16.msra.mxu0 %v198
    %211 = vmatprep.subr.bf16.mxu0 0
    %212 = vmatpush1.bf16.msra.mxu0 0
    %213 = vmatprep.subr.bf16.mxu0 0
    %214 = vmatpush1.bf16.msra.mxu0 0
    %215 = vmatprep.subr.bf16.mxu0 0
    %216 = vmatpush1.bf16.msra.mxu0 0
    %217 = vmatprep.subr.bf16.mxu0 0
    %218 = vmatpush1.bf16.msra.mxu0 0
    %219 = vmatprep.subr.bf16.mxu0 0
    %220 = vmatpush1.bf16.msra.mxu0 0
    %221 = vmatprep.subr.bf16.mxu0 0
    %222 = vmatpush1.bf16.msra.mxu0 0
    %223 = vmatprep.subr.bf16.mxu0 0
    %224 = vmatpush1.bf16.msra.mxu0 0
    %225 = vmatprep.subr.bf16.mxu0 0
    %226 = vmatpush1.bf16.msra.mxu0 0
    %227 = vmatprep.subr.bf16.mxu0 0
    %228 = vmatpush1.bf16.msra.mxu0 0
    %229 = vmatprep.subr.bf16.mxu0 0
    %230 = vmatpush1.bf16.msra.mxu0 0
    %231 = vmatprep.subr.bf16.mxu0 0
    %232 = vmatpush1.bf16.msra.mxu0 0
    %233 = vmatprep.subr.bf16.mxu0 0
    %234 = vmatpush1.bf16.msra.mxu0 0
    %235 = vmatprep.subr.bf16.mxu0 0
    %236 = vmatpush1.bf16.msra.mxu0 0
    %237 = vmatprep.subr.bf16.mxu0 0
    %238 = vmatpush1.bf16.msra.mxu0 0
    %239 = vmatprep.mubr.bf16.mxu0 0
    %240 = vmatmul.mubr.bf16.gmra.mrb[0].mxu0 %v205
    %v241 = vpop.f32.mrb[0].mxu0
    %v242 = vadd.f32 %v177, %v241
    %v243 = vpop.f32.mrb[0].mxu0
    %v244 = vadd.f32 %v181, %v243
    %v245 = vpop.f32.mrb[0].mxu0
    %v246 = vpop.f32.mrb[0].mxu0
    %247 = vdwg.mxu0
    %v248 = vmax.f32 %v242, 0.0
    %v249 = vmax.f32 %v244, 0.0
    %v250 = vpack.c.bf16 %v248, %v248
    %v251 = vpack.c.bf16 %v249, %v249
    %v252 = vld [vmem:[#allocation7] sm:$0xf]
    %v253 = vld [vmem:[#allocation7 + $0x4] sm:$0xf]
    %v254 = vld [vmem:[#allocation7 + $0x8] sm:$0xf]
    %v255 = vld [vmem:[#allocation7 + $0xc] sm:$0xf]
    %v256 = vld [vmem:[#allocation7 + $0x10] sm:$0xf]
    %v257 = vld [vmem:[#allocation7 + $0x14] sm:$0xf]
    %v258 = vld [vmem:[#allocation7 + $0x18] sm:$0xf]
    %v259 = vld [vmem:[#allocation7 + $0x1c] sm:$0xf]
    %v260 = vld [vmem:[#allocation7 + $0x20] sm:$0xf]
    %v261 = vld [vmem:[#allocation7 + $0x24] sm:$0xf]
    %v262 = vld [vmem:[#allocation7 + $0x28] sm:$0xf]
    %v263 = vld [vmem:[#allocation7 + $0x2c] sm:$0xf]
    %v264 = vld [vmem:[#allocation7 + $0x30] sm:$0xf]
    %v265 = vld [vmem:[#allocation7 + $0x34] sm:$0xf]
    %v266 = vld [vmem:[#allocation7 + $0x38] sm:$0xf]
    %v267 = vld [vmem:[#allocation7 + $0x3c] sm:$0xf]
    %v268 = vld [vmem:[#allocation7 + $0x40] sm:$0xf]
    %v269 = vld [vmem:[#allocation7 + $0x44] sm:$0xf]
    %v270 = vld [vmem:[#allocation7 + $0x48] sm:$0xf]
    %v271 = vld [vmem:[#allocation7 + $0x4c] sm:$0xf]
    %v272 = vld [vmem:[#allocation7 + $0x50] sm:$0xf]
    %v273 = vld [vmem:[#allocation7 + $0x54] sm:$0xf]
    %v274 = vld [vmem:[#allocation7 + $0x58] sm:$0xf]
    %v275 = vld [vmem:[#allocation7 + $0x5c] sm:$0xf]
    %v276 = vld [vmem:[#allocation7 + $0x60] sm:$0xf]
    %v277 = vld [vmem:[#allocation7 + $0x64] sm:$0xf]
    %v278 = vld [vmem:[#allocation7 + $0x68] sm:$0xf]
    %v279 = vld [vmem:[#allocation7 + $0x6c] sm:$0xf]
    %v280 = vld [vmem:[#allocation7 + $0x70] sm:$0xf]
    %v281 = vld [vmem:[#allocation7 + $0x74] sm:$0xf]
    %v282 = vld [vmem:[#allocation7 + $0x78] sm:$0xf]
    %v283 = vld [vmem:[#allocation7 + $0x7c] sm:$0xf]
    %v284 = vld [vmem:[%s6] sm:$0x1]
    %v286 = vlaneseq
    %v287 = vshrl.u32 %v286, 7
    %v288 = vsub.s32 0, %v287
    %v289 = vrot.slane %v284, %v288
    %v323 = vunpack.c.l.b16 %v252
    %v324 = vunpack.c.l.b16 %v253
    %v325 = vunpack.c.l.b16 %v254
    %v326 = vunpack.c.l.b16 %v255
    %v327 = vunpack.c.l.b16 %v256
    %v328 = vunpack.c.l.b16 %v257
    %v329 = vunpack.c.l.b16 %v258
    %v330 = vunpack.c.l.b16 %v259
    %v331 = vunpack.c.l.b16 %v260
    %v332 = vunpack.c.l.b16 %v261
    %v333 = vunpack.c.l.b16 %v262
    %v334 = vunpack.c.l.b16 %v263
    %v335 = vunpack.c.l.b16 %v264
    %v336 = vunpack.c.l.b16 %v265
    %v337 = vunpack.c.l.b16 %v266
    %v338 = vunpack.c.l.b16 %v267
    %v339 = vunpack.c.l.b16 %v268
    %v340 = vunpack.c.l.b16 %v269
    %v341 = vunpack.c.l.b16 %v270
    %v342 = vunpack.c.l.b16 %v271
    %v343 = vunpack.c.l.b16 %v272
    %v344 = vunpack.c.l.b16 %v273
    %v345 = vunpack.c.l.b16 %v274
    %v346 = vunpack.c.l.b16 %v275
    %v347 = vunpack.c.l.b16 %v276
    %v348 = vunpack.c.l.b16 %v277
    %v349 = vunpack.c.l.b16 %v278
    %v350 = vunpack.c.l.b16 %v279
    %v351 = vunpack.c.l.b16 %v280
    %v352 = vunpack.c.l.b16 %v281
    %v353 = vunpack.c.l.b16 %v282
    %v354 = vunpack.c.l.b16 %v283
    %v355 = vpack.c.b16 %v324, %v323
    %v356 = vpack.c.b16 %v326, %v325
    %v357 = vpack.c.b16 %v328, %v327
    %v358 = vpack.c.b16 %v330, %v329
    %v359 = vpack.c.b16 %v332, %v331
    %v360 = vpack.c.b16 %v334, %v333
    %v361 = vpack.c.b16 %v336, %v335
    %v362 = vpack.c.b16 %v338, %v337
    %v363 = vpack.c.b16 %v340, %v339
    %v364 = vpack.c.b16 %v342, %v341
    %v365 = vpack.c.b16 %v344, %v343
    %v366 = vpack.c.b16 %v346, %v345
    %v367 = vpack.c.b16 %v348, %v347
    %v368 = vpack.c.b16 %v350, %v349
    %v369 = vpack.c.b16 %v352, %v351
    %v370 = vpack.c.b16 %v354, %v353
    %387 = vmatprep.subr.bf16.mxu0 0
    %388 = vmatpush1.bf16.msra.mxu0 %v355
    %389 = vmatprep.subr.bf16.mxu0 0
    %390 = vmatpush1.bf16.msra.mxu0 %v356
    %391 = vmatprep.subr.bf16.mxu0 0
    %392 = vmatpush1.bf16.msra.mxu0 %v357
    %393 = vmatprep.subr.bf16.mxu0 0
    %394 = vmatpush1.bf16.msra.mxu0 %v358
    %395 = vmatprep.subr.bf16.mxu0 0
    %396 = vmatpush1.bf16.msra.mxu0 %v359
    %397 = vmatprep.subr.bf16.mxu0 0
    %398 = vmatpush1.bf16.msra.mxu0 %v360
    %399 = vmatprep.subr.bf16.mxu0 0
    %400 = vmatpush1.bf16.msra.mxu0 %v361
    %401 = vmatprep.subr.bf16.mxu0 0
    %402 = vmatpush1.bf16.msra.mxu0 %v362
    %403 = vmatprep.subr.bf16.mxu0 0
    %404 = vmatpush1.bf16.msra.mxu0 %v363
    %405 = vmatprep.subr.bf16.mxu0 0
    %406 = vmatpush1.bf16.msra.mxu0 %v364
    %407 = vmatprep.subr.bf16.mxu0 0
    %408 = vmatpush1.bf16.msra.mxu0 %v365
    %409 = vmatprep.subr.bf16.mxu0 0
    %410 = vmatpush1.bf16.msra.mxu0 %v366
    %411 = vmatprep.subr.bf16.mxu0 0
    %412 = vmatpush1.bf16.msra.mxu0 %v367
    %413 = vmatprep.subr.bf16.mxu0 0
    %414 = vmatpush1.bf16.msra.mxu0 %v368
    %415 = vmatprep.subr.bf16.mxu0 0
    %416 = vmatpush1.bf16.msra.mxu0 %v369
    %417 = vmatprep.subr.bf16.mxu0 0
    %418 = vmatpush1.bf16.msra.mxu0 %v370
    %419 = vmatprep.mubr.bf16.mxu0 %v251
    %420 = vmatmul.mubr.bf16.gmra.mrb[0].mxu0 %v250
    %v421 = vpop.f32.mrb[0].mxu0
    %v422 = vadd.f32 %v289, %v421
    %v423 = vpop.f32.mrb[0].mxu0
    %v424 = vpop.f32.mrb[0].mxu0
    %v425 = vpop.f32.mrb[0].mxu0
    %426 = vdwg.mxu0
    %v427 = vmax.f32 %v422, 0.0
    %v428 = vpack.c.bf16 %v427, %v427
    %v429 = vld [vmem:[#allocation8] sm:$0xf]
    %v430 = vld [vmem:[#allocation8 + $0x4] sm:$0xf]
    %v431 = vld [vmem:[#allocation8 + $0x8] sm:$0xf]
    %v432 = vld [vmem:[#allocation8 + $0xc] sm:$0xf]
    %v433 = vld [vmem:[#allocation8 + $0x10] sm:$0xf]
    %v434 = vld [vmem:[#allocation8 + $0x14] sm:$0xf]
    %v435 = vld [vmem:[#allocation8 + $0x18] sm:$0xf]
    %v436 = vld [vmem:[#allocation8 + $0x1c] sm:$0xf]
    %v437 = vld [vmem:[#allocation8 + $0x20] sm:$0xf]
    %v438 = vld [vmem:[#allocation8 + $0x24] sm:$0xf]
    %v439 = vld [vmem:[#allocation8 + $0x28] sm:$0xf]
    %v440 = vld [vmem:[#allocation8 + $0x2c] sm:$0xf]
    %v441 = vld [vmem:[#allocation8 + $0x30] sm:$0xf]
    %v442 = vld [vmem:[#allocation8 + $0x34] sm:$0xf]
    %v443 = vld [vmem:[#allocation8 + $0x38] sm:$0xf]
    %v444 = vld [vmem:[#allocation8 + $0x3c] sm:$0xf]
    %v445 = vld [vmem:[%s8] sm:$0x1]
    %v447 = vlaneseq
    %v448 = vshrl.u32 %v447, 7
    %v449 = vsub.s32 0, %v448
    %v450 = vrot.slane %v445, %v449
    %v468 = vunpack.c.l.b16 %v429
    %v469 = vunpack.c.l.b16 %v430
    %v470 = vunpack.c.l.b16 %v431
    %v471 = vunpack.c.l.b16 %v432
    %v472 = vunpack.c.l.b16 %v433
    %v473 = vunpack.c.l.b16 %v434
    %v474 = vunpack.c.l.b16 %v435
    %v475 = vunpack.c.l.b16 %v436
    %v476 = vunpack.c.l.b16 %v437
    %v477 = vunpack.c.l.b16 %v438
    %v478 = vunpack.c.l.b16 %v439
    %v479 = vunpack.c.l.b16 %v440
    %v480 = vunpack.c.l.b16 %v441
    %v481 = vunpack.c.l.b16 %v442
    %v482 = vunpack.c.l.b16 %v443
    %v483 = vunpack.c.l.b16 %v444
    %v484 = vpack.c.b16 %v469, %v468
    %v485 = vpack.c.b16 %v471, %v470
    %v486 = vpack.c.b16 %v473, %v472
    %v487 = vpack.c.b16 %v475, %v474
    %v488 = vpack.c.b16 %v477, %v476
    %v489 = vpack.c.b16 %v479, %v478
    %v490 = vpack.c.b16 %v481, %v480
    %v491 = vpack.c.b16 %v483, %v482
    %500 = vmatprep.subr.bf16.mxu0 0
    %501 = vmatpush1.bf16.msra.mxu0 %v484
    %502 = vmatprep.subr.bf16.mxu0 0
    %503 = vmatpush1.bf16.msra.mxu0 %v485
    %504 = vmatprep.subr.bf16.mxu0 0
    %505 = vmatpush1.bf16.msra.mxu0 %v486
    %506 = vmatprep.subr.bf16.mxu0 0
    %507 = vmatpush1.bf16.msra.mxu0 %v487
    %508 = vmatprep.subr.bf16.mxu0 0
    %509 = vmatpush1.bf16.msra.mxu0 %v488
    %510 = vmatprep.subr.bf16.mxu0 0
    %511 = vmatpush1.bf16.msra.mxu0 %v489
    %512 = vmatprep.subr.bf16.mxu0 0
    %513 = vmatpush1.bf16.msra.mxu0 %v490
    %514 = vmatprep.subr.bf16.mxu0 0
    %515 = vmatpush1.bf16.msra.mxu0 %v491
    %516 = vmatprep.subr.bf16.mxu0 0
    %517 = vmatpush1.bf16.msra.mxu0 0
    %518 = vmatprep.subr.bf16.mxu0 0
    %519 = vmatpush1.bf16.msra.mxu0 0
    %520 = vmatprep.subr.bf16.mxu0 0
    %521 = vmatpush1.bf16.msra.mxu0 0
    %522 = vmatprep.subr.bf16.mxu0 0
    %523 = vmatpush1.bf16.msra.mxu0 0
    %524 = vmatprep.subr.bf16.mxu0 0
    %525 = vmatpush1.bf16.msra.mxu0 0
    %526 = vmatprep.subr.bf16.mxu0 0
    %527 = vmatpush1.bf16.msra.mxu0 0
    %528 = vmatprep.subr.bf16.mxu0 0
    %529 = vmatpush1.bf16.msra.mxu0 0
    %530 = vmatprep.subr.bf16.mxu0 0
    %531 = vmatpush1.bf16.msra.mxu0 0
    %532 = vmatprep.mubr.bf16.mxu0 0
    %533 = vmatmul.mubr.bf16.gmra.mrb[0].mxu0 %v428
    %v534 = vpop.f32.mrb[0].mxu0
    %v535 = vadd.f32 %v450, %v534
    %v536 = vpop.f32.mrb[0].mxu0
    %v537 = vpop.f32.mrb[0].mxu0
    %v538 = vpop.f32.mrb[0].mxu0
    %539 = vdwg.mxu0
    %v540 = vmax.f32 %v535, 0.0
    %v541 = vpack.c.bf16 %v540, %v540
    %v542 = vld [vmem:[#allocation10] sm:$0xf]
    %v543 = vld [vmem:[#allocation10 + $0x4] sm:$0xf]
    %v544 = vld [vmem:[#allocation10 + $0x8] sm:$0xf]
    %v545 = vld [vmem:[#allocation10 + $0xc] sm:$0xf]
    %v546 = vld [vmem:[#allocation10 + $0x10] sm:$0xf]
    %v547 = vld [vmem:[#allocation10 + $0x14] sm:$0xf]
    %v548 = vld [vmem:[#allocation10 + $0x18] sm:$0xf]
    %v549 = vld [vmem:[#allocation10 + $0x1c] sm:$0xf]
    %v550 = vld [vmem:[#allocation10 + $0x20] sm:$0xf]
    %v551 = vld [vmem:[#allocation10 + $0x24] sm:$0xf]
    %v552 = vld [vmem:[#allocation10 + $0x28] sm:$0xf]
    %v553 = vld [vmem:[#allocation10 + $0x2c] sm:$0xf]
    %v554 = vld [vmem:[#allocation10 + $0x30] sm:$0xf]
    %v555 = vld [vmem:[#allocation10 + $0x34] sm:$0xf]
    %v556 = vld [vmem:[#allocation10 + $0x38] sm:$0xf]
    %v557 = vld [vmem:[#allocation10 + $0x3c] sm:$0xf]
    %v558 = vld [vmem:[%s10] sm:$0x1]
    %v560 = vlaneseq
    %v561 = vshrl.u32 %v560, 7
    %v562 = vsub.s32 0, %v561
    %v563 = vrot.slane %v558, %v562
    %v581 = vunpack.c.l.b16 %v542
    %v582 = vunpack.c.l.b16 %v543
    %v583 = vunpack.c.l.b16 %v544
    %v584 = vunpack.c.l.b16 %v545
    %v585 = vunpack.c.l.b16 %v546
    %v586 = vunpack.c.l.b16 %v547
    %v587 = vunpack.c.l.b16 %v548
    %v588 = vunpack.c.l.b16 %v549
    %v589 = vunpack.c.l.b16 %v550
    %v590 = vunpack.c.l.b16 %v551
    %v591 = vunpack.c.l.b16 %v552
    %v592 = vunpack.c.l.b16 %v553
    %v593 = vunpack.c.l.b16 %v554
    %v594 = vunpack.c.l.b16 %v555
    %v595 = vunpack.c.l.b16 %v556
    %v596 = vunpack.c.l.b16 %v557
    %v597 = vpack.c.b16 %v582, %v581
    %v598 = vpack.c.b16 %v584, %v583
    %v599 = vpack.c.b16 %v586, %v585
    %v600 = vpack.c.b16 %v588, %v587
    %v601 = vpack.c.b16 %v590, %v589
    %v602 = vpack.c.b16 %v592, %v591
    %v603 = vpack.c.b16 %v594, %v593
    %v604 = vpack.c.b16 %v596, %v595
    %613 = vmatprep.subr.bf16.mxu0 0
    %614 = vmatpush1.bf16.msra.mxu0 %v597
    %615 = vmatprep.subr.bf16.mxu0 0
    %616 = vmatpush1.bf16.msra.mxu0 %v598
    %617 = vmatprep.subr.bf16.mxu0 0
    %618 = vmatpush1.bf16.msra.mxu0 %v599
    %619 = vmatprep.subr.bf16.mxu0 0
    %620 = vmatpush1.bf16.msra.mxu0 %v600
    %621 = vmatprep.subr.bf16.mxu0 0
    %622 = vmatpush1.bf16.msra.mxu0 %v601
    %623 = vmatprep.subr.bf16.mxu0 0
    %624 = vmatpush1.bf16.msra.mxu0 %v602
    %625 = vmatprep.subr.bf16.mxu0 0
    %626 = vmatpush1.bf16.msra.mxu0 %v603
    %627 = vmatprep.subr.bf16.mxu0 0
    %628 = vmatpush1.bf16.msra.mxu0 %v604
    %629 = vmatprep.subr.bf16.mxu0 0
    %630 = vmatpush1.bf16.msra.mxu0 0
    %631 = vmatprep.subr.bf16.mxu0 0
    %632 = vmatpush1.bf16.msra.mxu0 0
    %633 = vmatprep.subr.bf16.mxu0 0
    %634 = vmatpush1.bf16.msra.mxu0 0
    %635 = vmatprep.subr.bf16.mxu0 0
    %636 = vmatpush1.bf16.msra.mxu0 0
    %637 = vmatprep.subr.bf16.mxu0 0
    %638 = vmatpush1.bf16.msra.mxu0 0
    %639 = vmatprep.subr.bf16.mxu0 0
    %640 = vmatpush1.bf16.msra.mxu0 0
    %641 = vmatprep.subr.bf16.mxu0 0
    %642 = vmatpush1.bf16.msra.mxu0 0
    %643 = vmatprep.subr.bf16.mxu0 0
    %644 = vmatpush1.bf16.msra.mxu0 0
    %645 = vmatprep.mubr.bf16.mxu0 0
    %646 = vmatmul.mubr.bf16.gmra.mrb[0].mxu0 %v541
    %v647 = vpop.f32.mrb[0].mxu0
    %v648 = vadd.f32 %v563, %v647
    %v649 = vpop.f32.mrb[0].mxu0
    %v650 = vpop.f32.mrb[0].mxu0
    %v651 = vpop.f32.mrb[0].mxu0
    %652 = vdwg.mxu0
    %v653 = vmax.f32 %v648, 0.0
    %v654 = vpack.c.bf16 %v653, %v653
    %v655 = vld [vmem:[#allocation11] sm:$0xf]
    %v656 = vld [vmem:[#allocation11 + $0x4] sm:$0xf]
    %v657 = vld [vmem:[#allocation11 + $0x8] sm:$0xf]
    %v658 = vld [vmem:[#allocation11 + $0xc] sm:$0xf]
    %v659 = vld [vmem:[#allocation11 + $0x10] sm:$0xf]
    %v660 = vld [vmem:[#allocation11 + $0x14] sm:$0xf]
    %v661 = vld [vmem:[#allocation11 + $0x18] sm:$0xf]
    %v662 = vld [vmem:[#allocation11 + $0x1c] sm:$0xf]
    %v663 = vld [vmem:[#allocation11 + $0x20] sm:$0xf]
    %v664 = vld [vmem:[#allocation11 + $0x24] sm:$0xf]
    %v665 = vld [vmem:[#allocation11 + $0x28] sm:$0xf]
    %v666 = vld [vmem:[#allocation11 + $0x2c] sm:$0xf]
    %v667 = vld [vmem:[#allocation11 + $0x30] sm:$0xf]
    %v668 = vld [vmem:[#allocation11 + $0x34] sm:$0xf]
    %v669 = vld [vmem:[#allocation11 + $0x38] sm:$0xf]
    %v670 = vld [vmem:[#allocation11 + $0x3c] sm:$0xf]
    %v671 = vld [vmem:[%s12] sm:$0x1]
    %v673 = vlaneseq
    %v674 = vshrl.u32 %v673, 7
    %v675 = vsub.s32 0, %v674
    %v676 = vrot.slane %v671, %v675
    %v694 = vunpack.c.l.b16 %v655
    %v695 = vunpack.c.l.b16 %v656
    %v696 = vunpack.c.l.b16 %v657
    %v697 = vunpack.c.l.b16 %v658
    %v698 = vunpack.c.l.b16 %v659
    %v699 = vunpack.c.l.b16 %v660
    %v700 = vunpack.c.l.b16 %v661
    %v701 = vunpack.c.l.b16 %v662
    %v702 = vunpack.c.l.b16 %v663
    %v703 = vunpack.c.l.b16 %v664
    %v704 = vunpack.c.l.b16 %v665
    %v705 = vunpack.c.l.b16 %v666
    %v706 = vunpack.c.l.b16 %v667
    %v707 = vunpack.c.l.b16 %v668
    %v708 = vunpack.c.l.b16 %v669
    %v709 = vunpack.c.l.b16 %v670
    %v710 = vpack.c.b16 %v695, %v694
    %v711 = vpack.c.b16 %v697, %v696
    %v712 = vpack.c.b16 %v699, %v698
    %v713 = vpack.c.b16 %v701, %v700
    %v714 = vpack.c.b16 %v703, %v702
    %v715 = vpack.c.b16 %v705, %v704
    %v716 = vpack.c.b16 %v707, %v706
    %v717 = vpack.c.b16 %v709, %v708
    %726 = vmatprep.subr.bf16.mxu0 0
    %727 = vmatpush1.bf16.msra.mxu0 %v710
    %728 = vmatprep.subr.bf16.mxu0 0
    %729 = vmatpush1.bf16.msra.mxu0 %v711
    %730 = vmatprep.subr.bf16.mxu0 0
    %731 = vmatpush1.bf16.msra.mxu0 %v712
    %732 = vmatprep.subr.bf16.mxu0 0
    %733 = vmatpush1.bf16.msra.mxu0 %v713
    %734 = vmatprep.subr.bf16.mxu0 0
    %735 = vmatpush1.bf16.msra.mxu0 %v714
    %736 = vmatprep.subr.bf16.mxu0 0
    %737 = vmatpush1.bf16.msra.mxu0 %v715
    %738 = vmatprep.subr.bf16.mxu0 0
    %739 = vmatpush1.bf16.msra.mxu0 %v716
    %740 = vmatprep.subr.bf16.mxu0 0
    %741 = vmatpush1.bf16.msra.mxu0 %v717
    %742 = vmatprep.subr.bf16.mxu0 0
    %743 = vmatpush1.bf16.msra.mxu0 0
    %744 = vmatprep.subr.bf16.mxu0 0
    %745 = vmatpush1.bf16.msra.mxu0 0
    %746 = vmatprep.subr.bf16.mxu0 0
    %747 = vmatpush1.bf16.msra.mxu0 0
    %748 = vmatprep.subr.bf16.mxu0 0
    %749 = vmatpush1.bf16.msra.mxu0 0
    %750 = vmatprep.subr.bf16.mxu0 0
    %751 = vmatpush1.bf16.msra.mxu0 0
    %752 = vmatprep.subr.bf16.mxu0 0
    %753 = vmatpush1.bf16.msra.mxu0 0
    %754 = vmatprep.subr.bf16.mxu0 0
    %755 = vmatpush1.bf16.msra.mxu0 0
    %756 = vmatprep.subr.bf16.mxu0 0
    %757 = vmatpush1.bf16.msra.mxu0 0
    %758 = vmatprep.mubr.bf16.mxu0 0
    %759 = vmatmul.mubr.bf16.gmra.mrb[0].mxu0 %v654
    %v760 = vpop.f32.mrb[0].mxu0
    %v761 = vadd.f32 %v676, %v760
    %v762 = vpop.f32.mrb[0].mxu0
    %v763 = vpop.f32.mrb[0].mxu0
    %v764 = vpop.f32.mrb[0].mxu0
    %765 = vdwg.mxu0
    %v766 = vtanh.pop %v761
    %767 = vst [vmem:[#allocation13] sm:$0xff] %v766
    // Predicated region
    $region78: #{tpu_custom_call.1} parent=1 // pred_check
      _
    $region79: #{tpu_custom_call.1} parent=1 // pred_check_branch
      %769 = sbr.rel (0) target = $region81
    $region80: #{tpu_custom_call.1} parent=1 // pred_region
      %s771 = ssub.s32 128, 128
      %772 = vsyncadd [#allocation4], %s771
      %s774 = sshll.u32 [#allocation13], 4
      %s775 = int_to_ptr.vmem [resolvable:$true] %s774
      %777 = dma.vmem_to_hbm [thread:$0]  %s775, 128, %s13, [#allocation4]
    $region81: #{tpu_custom_call.1} parent=1 // pred_fallthru
      _
    // Predicated region
    $region82: #{tpu_custom_call.1} parent=1 // pred_check
      _
    $region83: #{tpu_custom_call.1} parent=1 // pred_check_branch
      %779 = sbr.rel (0) target = $region85
    $region84: #{tpu_custom_call.1} parent=1 // pred_region
      %780 = dma.done [#allocation4], 128
    $region85: #{tpu_custom_call.1} parent=1 // pred_fallthru
      _
    %781 = vsyncpa [#allocation3], 1
    %782 = vsyncpa [#allocation6], 1
    %783 = vsyncpa [#allocation9], 1
    %784 = vsyncpa [#allocation12], 1
    %785 = vsyncpa [#allocation4], 1

</llo_original>
